<compile_context>
chip_gen: v7x
topology: tpu7x:2x2x1
jax: 0.10.0
libtpu: 0.0.40
codegen_flags: <defaults>
</compile_context>

<pallas_src>
import functools

import jax
import jax.numpy as jnp
from jax.experimental import pallas as pl
from jax.experimental.pallas import tpu as pltpu


def _accumulate_lane_dense(acc_ref, xp):
    """Fold the (tc, tn) block `xp` into the (tc, 128) accumulator using only
    lane-aligned, 128-wide vreg adds (pure VPU).  No cross-lane (XLU) work."""
    _, tn = xp.shape
    k, r = divmod(tn, 128)
    part = None
    for i in range(k):                         # static unroll; tn is capped so k <= 64
        chunk = xp[:, i * 128:(i + 1) * 128]
        part = chunk if part is None else part + chunk
    if part is not None:
        acc_ref[...] += part
    if r:
        # Tail narrower than a vreg: masked vreg add into the first r lanes.
        acc_ref[:, 0:r] += xp[:, k * 128:tn]


def _gem_kernel(p_ref, x_ref, o_ref, acc_ref, *, eps, inv_n):
    ni = pl.program_id(2)

    @pl.when(ni == 0)
    def _():
        acc_ref[...] = jnp.zeros_like(acc_ref)

    p = p_ref[0]                               # learnable exponent (SMEM scalar)
    x = x_ref[...].astype(jnp.float32)         # (tc, tn)
    xc = jnp.maximum(x, eps)                   # clamp(min=eps) -> strictly > 0

    is_p3 = p == 3.0                           # module default; exact by construction

    @pl.when(is_p3)
    def _():                                   # VPU-only power; frees the EUP slot
        _accumulate_lane_dense(acc_ref, xc * xc * xc)

    @pl.when(jnp.logical_not(is_p3))
    def _():                                   # generic fractional p on the EUP
        _accumulate_lane_dense(acc_ref, jnp.exp(p * jnp.log(xc)))

    @pl.when(ni == pl.num_programs(2) - 1)
    def _():
        s = jnp.sum(acc_ref[...], axis=-1, keepdims=True)   # one XLU reduce / block
        mean = s * inv_n                                     # avg_pool2d over all H*W
        o_ref[...] = jnp.exp(jnp.log(mean) / p).astype(o_ref.dtype)   # mean^(1/p)


def _pick_tile(dim, unit, cap):
    """Largest multiple of `unit` that divides `dim` and is <= cap; else full dim."""
    if dim <= cap:
        return dim
    if dim % unit == 0:
        t = (min(cap, dim) // unit) * unit
        while t >= unit:
            if dim % t == 0:
                return t
            t -= unit
    return dim  # full dimension is always a legal block size


def _vmem_capacity_bytes():
    try:
        info = pltpu.get_tpu_info()
        cap = getattr(info, "vmem_capacity_bytes", None)
        return int(cap) if cap else None
    except Exception:
        return None


def gem(x, p, eps=1e-6, *, max_block_n=None):
    """GeM pooling.  x: (B, C, H, W); p: shape-(1,) exponent.  Returns (B, C, 1, 1)."""
    B, C, H, W = x.shape
    N = H * W
    xr = x.reshape(B, C, N)                    # free view, no transpose
    itemsize = jnp.dtype(x.dtype).itemsize

    # Per-chip budgets: 2x the input block (double-buffered) must stay well inside
    # scoped VMEM; v7x has 64 MiB per TensorCore, v5e/v6e have 128 MiB.
    vmem_cap = _vmem_capacity_bytes()
    if vmem_cap is None:
        blk_budget, vmem_limit = 8 << 20, 32 << 20       # conservative fallback
    elif vmem_cap >= (100 << 20):                        # v5e / v6e
        blk_budget, vmem_limit = 16 << 20, 64 << 20
    else:                                                # v7x
        blk_budget, vmem_limit = 12 << 20, 44 << 20
    elems_budget = max(blk_budget // itemsize, 8 * 128)

    # Spatial tile: lane-dense multiple of 128 dividing N when possible, otherwise
    # the full N (single reduction step).  Capped so the in-kernel unrolled
    # lane-fold stays short (<= 64 chunks) and >= 8 channel rows fit the budget.
    tn_cap = min(elems_budget // 8, 64 * 128)
    if max_block_n is not None:
        tn_cap = min(tn_cap, max_block_n)
    tn = _pick_tile(N, 128, max(tn_cap, 128))

    # Channel tile: grow up to the block budget (key for small N such as 7x7 /
    # 14x14 feature maps -> big contiguous multi-channel DMAs per step).
    tc_cap = min(max(elems_budget // max(tn, 1), 8), 2048)
    tc = _pick_tile(C, 8, tc_cap)

    # Megacore: keep >= 2 parallel grid blocks when the channel count allows it.
    if B * (C // tc) < 2:
        tc_half = _pick_tile(C, 8, max(8, tc // 2))
        if 0 < tc_half < tc and C % tc_half == 0:
            tc = tc_half

    # Never let scoped VMEM be the binding constraint for the chosen block.
    block_bytes = tc * tn * itemsize
    vmem_limit = max(vmem_limit, 2 * block_bytes + tc * 128 * 4 + (2 << 20))

    grid = (B, C // tc, N // tn)
    kernel = functools.partial(_gem_kernel, eps=float(eps), inv_n=1.0 / float(N))

    out = pl.pallas_call(
        kernel,
        grid=grid,
        in_specs=[
            pl.BlockSpec(memory_space=pltpu.MemorySpace.SMEM),            # p scalar
            pl.BlockSpec((None, tc, tn), lambda b, ci, ni: (b, ci, ni)),  # x tile
        ],
        out_specs=pl.BlockSpec((None, tc, 1), lambda b, ci, ni: (b, ci, 0)),
        out_shape=jax.ShapeDtypeStruct((B, C, 1), x.dtype),
        scratch_shapes=[pltpu.VMEM((tc, 128), jnp.float32)],
        compiler_params=pltpu.CompilerParams(
            dimension_semantics=("parallel", "parallel", "arbitrary"),
            vmem_limit_bytes=int(vmem_limit),
        ),
    )(p.reshape(-1).astype(jnp.float32), xr)

    return out.reshape(B, C, 1, 1)


def gem_ref(x, p, eps=1e-6):
    """Pure-JAX reference of the PyTorch forward."""
    xf = x.astype(jnp.float32)
    pf = p.reshape(1, 1, 1, 1).astype(jnp.float32)
    xc = jnp.maximum(xf, eps)
    m = jnp.mean(xc ** pf, axis=(2, 3), keepdims=True)
    return (m ** (1.0 / pf)).astype(x.dtype)


if __name__ == "__main__":
    key = jax.random.PRNGKey(0)
    k1, k2, k3 = jax.random.split(key, 3)

    # Case 1: module defaults (p = 3.0 -> VPU fast path), small NCHW input.
    x1 = jax.random.normal(k1, (2, 4, 16, 16), jnp.float32)
    p1 = jnp.ones((1,), jnp.float32) * 3.0          # GeM.__init__ default
    y1 = gem(x1, p1)
    jax.block_until_ready(y1)
    r1 = gem_ref(x1, p1)
    assert y1.shape == (2, 4, 1, 1)
    assert jnp.allclose(y1, r1, atol=1e-5, rtol=1e-4), "GeM mismatch (p=3)"

    # Case 2: fractional p (EUP path) + multi-step N-tiled accumulator (4 steps).
    x2 = jax.random.normal(k2, (2, 16, 32, 32), jnp.float32) * 2.0
    p2 = jnp.ones((1,), jnp.float32) * 2.5
    y2 = gem(x2, p2, eps=1e-6, max_block_n=256)
    jax.block_until_ready(y2)
    r2 = gem_ref(x2, p2)
    assert y2.shape == (2, 16, 1, 1)
    assert jnp.allclose(y2, r2, atol=1e-5, rtol=1e-4), "GeM mismatch (p=2.5)"

    # Case 3: canonical small feature map (14x14 -> N=196, not a multiple of 128),
    # exercising the masked tail-lane accumulation and single-step N path.
    x3 = jnp.abs(jax.random.normal(k3, (1, 8, 14, 14), jnp.float32)) + 0.1
    p3 = jnp.ones((1,), jnp.float32) * 3.0
    y3 = gem(x3, p3)
    jax.block_until_ready(y3)
    r3 = gem_ref(x3, p3)
    assert y3.shape == (1, 8, 1, 1)
    assert jnp.allclose(y3, r3, atol=1e-5, rtol=1e-4), "GeM mismatch (N=196)"

    print("KERNEL_OK")
</pallas_src>

<mosaic_0001>
module attributes {stable_mosaic.version = 11 : i64} {
  func.func @_gem_kernel(%arg0: i32, %arg1: i32, %arg2: i32, %arg3: memref<1xf32, #tpu.memory_space<smem>>, %arg4: memref<1x4x256xf32, #tpu.memory_space<vmem>>, %arg5: memref<1x4x1xf32, #tpu.memory_space<vmem>>, %arg6: memref<4x128xf32, #tpu.memory_space<vmem>>) attributes {dimension_semantics = [#tpu.dimension_semantics<parallel>, #tpu.dimension_semantics<parallel>, #tpu.dimension_semantics<arbitrary>], iteration_bounds = array<i64: 2, 1, 1>, scalar_prefetch = 0 : i64, scratch_operands = 1 : i64, tpu.core_type = #tpu.core_type<tc>, window_params = [{transform_indices = @transform_0, window_bounds = array<i64: 1>}, {transform_indices = @transform_1, window_bounds = array<i64: 1, 4, 256>}, {transform_indices = @transform_2, window_bounds = array<i64: 1, 4, 1>}]} {
    %c0_i32 = arith.constant 0 : i32
    %0 = arith.cmpi eq, %arg2, %c0_i32 : i32
    %1 = arith.extui %0 : i1 to i32
    %c0_i32_0 = arith.constant 0 : i32
    %2 = arith.cmpi ne, %1, %c0_i32_0 : i32
    scf.if %2 {
      %cst_9 = arith.constant 0.000000e+00 : f32
      %17 = vector.broadcast %cst_9 : f32 to vector<4x128xf32>
      %c0_10 = arith.constant 0 : index
      %c0_11 = arith.constant 0 : index
      %18 = vector.load %arg6[%c0_10, %c0_11] : memref<4x128xf32, #tpu.memory_space<vmem>>, vector<4x128xf32>
      tpu.vector_store %arg6[%c0_10, %c0_11], %17 {strides = array<i32>} : memref<4x128xf32, #tpu.memory_space<vmem>>, vector<4x128xf32>,
    } else {
    }
    %c0 = arith.constant 0 : index
    %3 = memref.load %arg3[%c0] : memref<1xf32, #tpu.memory_space<smem>>
    %c0_1 = arith.constant 0 : index
    %c0_2 = arith.constant 0 : index
    %c0_3 = arith.constant 0 : index
    %4 = vector.load %arg4[%c0_1, %c0_2, %c0_3] : memref<1x4x256xf32, #tpu.memory_space<vmem>>, vector<1x4x256xf32>
    %5 = vector.shape_cast %4 : vector<1x4x256xf32> to vector<4x256xf32>
    %cst = arith.constant 9.99999997E-7 : f32
    %6 = vector.broadcast %cst : f32 to vector<4x256xf32>
    %7 = arith.maximumf %5, %6 : vector<4x256xf32>
    %cst_4 = arith.constant 3.000000e+00 : f32
    %8 = arith.cmpf oeq, %3, %cst_4 : f32
    %9 = arith.extui %8 : i1 to i32
    %c0_i32_5 = arith.constant 0 : i32
    %10 = arith.cmpi ne, %9, %c0_i32_5 : i32
    scf.if %10 {
      %17 = arith.mulf %7, %7 : vector<4x256xf32>
      %18 = arith.mulf %17, %7 : vector<4x256xf32>
      %19 = vector.extract_strided_slice %18 {offsets = [0, 0], sizes = [4, 128], strides = [1, 1]} : vector<4x256xf32> to vector<4x128xf32>
      %20 = vector.extract_strided_slice %18 {offsets = [0, 128], sizes = [4, 128], strides = [1, 1]} : vector<4x256xf32> to vector<4x128xf32>
      %21 = arith.addf %19, %20 : vector<4x128xf32>
      %c0_9 = arith.constant 0 : index
      %c0_10 = arith.constant 0 : index
      %22 = vector.load %arg6[%c0_9, %c0_10] : memref<4x128xf32, #tpu.memory_space<vmem>>, vector<4x128xf32>
      %23 = arith.addf %22, %21 : vector<4x128xf32>
      %c0_11 = arith.constant 0 : index
      %c0_12 = arith.constant 0 : index
      %24 = vector.load %arg6[%c0_11, %c0_12] : memref<4x128xf32, #tpu.memory_space<vmem>>, vector<4x128xf32>
      tpu.vector_store %arg6[%c0_11, %c0_12], %23 {strides = array<i32>} : memref<4x128xf32, #tpu.memory_space<vmem>>, vector<4x128xf32>,
    } else {
    }
    %true = arith.constant true
    %11 = arith.xori %8, %true : i1
    %12 = arith.extui %11 : i1 to i32
    %c0_i32_6 = arith.constant 0 : i32
    %13 = arith.cmpi ne, %12, %c0_i32_6 : i32
    scf.if %13 {
      %17 = math.log %7 : vector<4x256xf32>
      %18 = vector.broadcast %3 : f32 to vector<4x256xf32>
      %19 = arith.mulf %18, %17 : vector<4x256xf32>
      %20 = math.exp %19 : vector<4x256xf32>
      %21 = vector.extract_strided_slice %20 {offsets = [0, 0], sizes = [4, 128], strides = [1, 1]} : vector<4x256xf32> to vector<4x128xf32>
      %22 = vector.extract_strided_slice %20 {offsets = [0, 128], sizes = [4, 128], strides = [1, 1]} : vector<4x256xf32> to vector<4x128xf32>
      %23 = arith.addf %21, %22 : vector<4x128xf32>
      %c0_9 = arith.constant 0 : index
      %c0_10 = arith.constant 0 : index
      %24 = vector.load %arg6[%c0_9, %c0_10] : memref<4x128xf32, #tpu.memory_space<vmem>>, vector<4x128xf32>
      %25 = arith.addf %24, %23 : vector<4x128xf32>
      %c0_11 = arith.constant 0 : index
      %c0_12 = arith.constant 0 : index
      %26 = vector.load %arg6[%c0_11, %c0_12] : memref<4x128xf32, #tpu.memory_space<vmem>>, vector<4x128xf32>
      tpu.vector_store %arg6[%c0_11, %c0_12], %25 {strides = array<i32>} : memref<4x128xf32, #tpu.memory_space<vmem>>, vector<4x128xf32>,
    } else {
    }
    %c0_i32_7 = arith.constant 0 : i32
    %14 = arith.cmpi eq, %arg2, %c0_i32_7 : i32
    %15 = arith.extui %14 : i1 to i32
    %c0_i32_8 = arith.constant 0 : i32
    %16 = arith.cmpi ne, %15, %c0_i32_8 : i32
    scf.if %16 {
      %c0_9 = arith.constant 0 : index
      %c0_10 = arith.constant 0 : index
      %17 = vector.load %arg6[%c0_9, %c0_10] : memref<4x128xf32, #tpu.memory_space<vmem>>, vector<4x128xf32>
      %cst_11 = arith.constant dense<0.000000e+00> : vector<4xf32>
      %18 = vector.multi_reduction <add>, %17, %cst_11 [1] : vector<4x128xf32> to vector<4xf32>
      %19 = vector.shape_cast %18 : vector<4xf32> to vector<4x1xf32>
      %cst_12 = arith.constant 3.906250e-03 : f32
      %20 = vector.broadcast %cst_12 : f32 to vector<4x1xf32>
      %21 = arith.mulf %19, %20 : vector<4x1xf32>
      %22 = math.log %21 : vector<4x1xf32>
      %23 = vector.broadcast %3 : f32 to vector<4x1xf32>
      %24 = arith.divf %22, %23 : vector<4x1xf32>
      %25 = math.exp %24 : vector<4x1xf32>
      %c0_13 = arith.constant 0 : index
      %c0_14 = arith.constant 0 : index
      %c0_15 = arith.constant 0 : index
      %26 = vector.load %arg5[%c0_13, %c0_14, %c0_15] : memref<1x4x1xf32, #tpu.memory_space<vmem>>, vector<1x4x1xf32>
      %27 = vector.shape_cast %26 : vector<1x4x1xf32> to vector<4x1xf32>
      %28 = vector.shape_cast %25 : vector<4x1xf32> to vector<1x4x1xf32>
      tpu.vector_store %arg5[%c0_13, %c0_14, %c0_15], %28 {strides = array<i32>} : memref<1x4x1xf32, #tpu.memory_space<vmem>>, vector<1x4x1xf32>,
    } else {
    }
    return
  }
  func.func @transform_0(%arg0: i32, %arg1: i32, %arg2: i32) -> i32 {
    %c0_i32 = arith.constant 0 : i32
    %c0_i32_0 = arith.constant 0 : i32
    return %c0_i32 : i32
  }
  func.func @transform_1(%arg0: i32, %arg1: i32, %arg2: i32) -> (i32, i32, i32) {
    %c0_i32 = arith.constant 0 : i32
    return %arg0, %arg1, %arg2 : i32, i32, i32
  }
  func.func @transform_2(%arg0: i32, %arg1: i32, %arg2: i32) -> (i32, i32, i32) {
    %c0_i32 = arith.constant 0 : i32
    %c0_i32_0 = arith.constant 0 : i32
    return %arg0, %arg1, %c0_i32 : i32, i32, i32
  }
}

</mosaic_0001>

<llo_original>
// kernel: tpu_custom_call.1
$region0: #{tpu_custom_call.1}
  #allocation0 [shape = 'u32[]', space=smem, size = 0x4, offset = 0x4, fixed_abs, tag = 'smem constant byte address 0x4 - core index']
  #allocation1 [shape = 'u32[144,128]{1,0:T(1,128)}', space=vmem, size = 0x12000, scoped, tag = 'internal scratch']
  #allocation2 [shape = 'f32[4,128]{1,0:T(4,128)}', space=vmem, size = 0x800, scoped, tag = 'scratch operand']
  #allocation3 [shape = 'f32[1]{0:T(128)S(6)}', space=smem, size = 0x200, scoped, tag = 'scoped memory for tpu_custom_call.1']
  %s0 = inlined_call_operand.<no memory space> [shape: f32[1], index: 0, kind: input, shape index: {}]
  %s1 = inlined_call_operand.hbm [shape: f32[2,4,256], index: 1, kind: input, shape index: {}]
  %s2 = inlined_call_operand.vmem [shape: f32[2,4,1], index: 2, kind: output, shape index: {}]
  %s3 = sld [smem:[#allocation0]]
  $region61: #{tpu_custom_call.1} parent=0
    _
  %s5 = ssub.s32 1, %s3
  %s6 = scalar_select 0, %s5, %s3
  %7 = sst [smem:[#allocation3]] %s0
  $region1: #{tpu_custom_call.1} parent=0
    #allocation4 [shape = 'u8[8192]{0}', space=vmem, size = 0x2000, scoped, tag = 'input window, operand 1']
    #allocation5 [shape = 's32[2]{0}', space=sflag, size = 0x8, scoped, tag = 'scoped memory for tpu_custom_call.1']
    %8 = vsyncpa [#allocation5], 0
    %s9 = scalar_lea.sflag [#allocation5], 1
    %10 = vsyncpa %s9, 0
    loop: start=0, step=1, limit=4
    $region2: #{tpu_custom_call.1} parent=1 // loop_pre_header
      _
    $region3: #{tpu_custom_call.1} parent=1 // loop_header
      %s12 = sphi 0, %s16
      %p13 = scmp.ge.s32.totalorder %s12, 4
      %s19 = sphi 0, %s38
      %s20 = sphi 0, %s34
      %s21 = sphi 0, %s30
      %s22 = sphi 0, %s19
      %s23 = sphi 0, %s20
      %s24 = sphi 0, %s21
      %s25 = sphi 0, %s22
      %s26 = sphi 0, %s23
      %s27 = sphi 0, %s24
      %s39 = sphi 0, %s39
      %s41 = sphi 0, %s39
      %s42 = sphi 0, %s41
      %s56 = sphi 0, %s42
      %s66 = sphi 0, %s68
      %s69 = sphi 0, %s66
      %s70 = sphi 0, %s69
      %s86 = sphi 0, %s70
      %s94 = sphi 0, %s96
      %s97 = sphi 0, %s94
      %s98 = sphi 0, %s97
      %s114 = sphi 0, %s98
    $region4: #{tpu_custom_call.1} parent=1 // loop_header_branch
      %15 = sbr.rel (%p13) target = $region8
    $region5: #{tpu_custom_call.1} parent=1 // loop_body
      %s17 = ssub.s32 %s12, 1
      %s18 = ssub.s32 %s12, 2
      %s28 = sadd.s32 1, %s21
      %p29 = scmp.ge.s32.totalorder %s28, 1
      %s30 = scalar_select %p29, 0, %s28
      %s31 = sadd.s32 1, %s20
      %s32 = scalar_select %p29, %s31, %s20
      %p33 = scmp.ge.s32.totalorder %s32, 1
      %s34 = scalar_select %p33, 0, %s32
      %s35 = sadd.s32 1, %s19
      %s36 = scalar_select %p33, %s35, %s19
      %p37 = scmp.ge.s32.totalorder %s36, 2
      %s38 = scalar_select %p37, 0, %s36
      %s40 = sadd.s32 %s39, 1
      %p43 = scmp.eq.s32.totalorder %s12, 1
      %p44 = scmp.ne.s32.totalorder %s39, %s41
      %p45 = scmp.eq.s32.totalorder %s12, 0
      %p46 = por %p44, %p45
      %p47 = scmp.ne.s32.totalorder %s39, %s41
      %p48 = scmp.eq.s32.totalorder %s17, 1
      %p49 = por %p47, %p48
      %p50 = scmp.ne.s32.totalorder %s41, %s42
      %p51 = scmp.eq.s32.totalorder %s17, 0
      %p52 = por %p50, %p51
      %p53 = scmp.ne.s32.totalorder %s41, %s42
      %p54 = scmp.eq.s32.totalorder %s18, 1
      %p55 = por %p53, %p54
      %p57 = scmp.ne.s32.totalorder %s42, %s56
      %p58 = scmp.eq.s32.totalorder %s18, 0
      %p59 = por %p57, %p58
      %s60 = ssub.s32 %s19, %s38
      %s61 = ssub.s32 %s20, %s34
      %s62 = sor.u32 %s60, %s61
      %s63 = ssub.s32 %s21, %s30
      %s64 = sor.u32 %s62, %s63
      %p65 = scmp.eq.s32.totalorder %s64, 0
      %s67 = sadd.s32 %s66, 1
      %s68 = scalar_select %p65, %s66, %s67
      %p71 = pneg %p65
      %p72 = scmp.eq.s32.totalorder %s12, 1
      %p73 = por %p71, %p72
      %p74 = scmp.ne.s32.totalorder %s66, %s69
      %p75 = scmp.eq.s32.totalorder %s12, 0
      %p76 = por %p74, %p75
      %p77 = scmp.ne.s32.totalorder %s66, %s69
      %p78 = scmp.eq.s32.totalorder %s17, 1
      %p79 = por %p77, %p78
      %p80 = scmp.ne.s32.totalorder %s69, %s70
      %p81 = scmp.eq.s32.totalorder %s17, 0
      %p82 = por %p80, %p81
      %p83 = scmp.ne.s32.totalorder %s69, %s70
      %p84 = scmp.eq.s32.totalorder %s18, 1
      %p85 = por %p83, %p84
      %p87 = scmp.ne.s32.totalorder %s70, %s86
      %p88 = scmp.eq.s32.totalorder %s18, 0
      %p89 = por %p87, %p88
      %s90 = ssub.s32 %s19, %s38
      %s91 = ssub.s32 %s20, %s34
      %s92 = sor.u32 %s90, %s91
      %p93 = scmp.eq.s32.totalorder %s92, 0
      %s95 = sadd.s32 %s94, 1
      %s96 = scalar_select %p93, %s94, %s95
      %p99 = pneg %p93
      %p100 = scmp.eq.s32.totalorder %s12, 1
      %p101 = por %p99, %p100
      %p102 = scmp.ne.s32.totalorder %s94, %s97
      %p103 = scmp.eq.s32.totalorder %s12, 0
      %p104 = por %p102, %p103
      %p105 = scmp.ne.s32.totalorder %s94, %s97
      %p106 = scmp.eq.s32.totalorder %s17, 1
      %p107 = por %p105, %p106
      %p108 = scmp.ne.s32.totalorder %s97, %s98
      %p109 = scmp.eq.s32.totalorder %s17, 0
      %p110 = por %p108, %p109
      %p111 = scmp.ne.s32.totalorder %s97, %s98
      %p112 = scmp.eq.s32.totalorder %s18, 1
      %p113 = por %p111, %p112
      %p115 = scmp.ne.s32.totalorder %s98, %s114
      %p116 = scmp.eq.s32.totalorder %s18, 0
      %p117 = por %p115, %p116
      %p118 = scmp.le.s32.totalorder 1, %s12
      %p119 = scmp.lt.s32.totalorder %s12, 3
      %p120 = pnand %p118, %p119
      %p121 = pneg %p120
      // Predicated region
      $region9: #{tpu_custom_call.1} parent=5 // pred_check
        _
      $region10: #{tpu_custom_call.1} parent=5 // pred_check_branch
        %123 = sbr.rel (%p120) target = $region12
      $region11: #{tpu_custom_call.1} parent=5 // pred_region
        %s124 = ssub.s32 %s12, 1
        // Predicated region
        $region13: #{tpu_custom_call.1} parent=11 // pred_check
          %p125 = pneg %p52
        $region14: #{tpu_custom_call.1} parent=11 // pred_check_branch
          %127 = sbr.rel (%p125) target = $region16
        $region15: #{tpu_custom_call.1} parent=11 // pred_region
          _
        $region16: #{tpu_custom_call.1} parent=11 // pred_fallthru
          _
      $region12: #{tpu_custom_call.1} parent=5 // pred_fallthru
        _
      %p128 = scmp.lt.s32.totalorder %s12, 2
      // Predicated region
      $region17: #{tpu_custom_call.1} parent=5 // pred_check
        %p129 = pneg %p128
      $region18: #{tpu_custom_call.1} parent=5 // pred_check_branch
        %131 = sbr.rel (%p129) target = $region20
      $region19: #{tpu_custom_call.1} parent=5 // pred_region
        // Predicated region
        $region21: #{tpu_custom_call.1} parent=19 // pred_check
          %p132 = pneg %p76
        $region22: #{tpu_custom_call.1} parent=19 // pred_check_branch
          %134 = sbr.rel (%p132) target = $region24
        $region23: #{tpu_custom_call.1} parent=19 // pred_region
          %s135 = sand.u32 %s66, 1
          %s136 = scalar_lea.sflag [#allocation5], %s135
          %s137 = sand.u32 %s66, 1
          %s138 = smul.addr %s137, 8
          %s139 = scalar_lea.vmem [#allocation4], %s138
          %s140 = smul.u32 2, %s21
          %s142 = ssub.s32 128, 128
          %143 = vsyncadd %s136, %s142
          %s144 = smul.addr %s20, 2
          %s145 = sadd.s32 %s140, %s144
          %s146 = smul.addr %s19, 2
          %s147 = sadd.s32 %s145, %s146
          %s148 = smul.addr %s147, 64
          %s149 = scalar_lea.hbm %s1, %s148
          %s151 = sshll.u32 %s139, 4
          %s152 = int_to_ptr.vmem [resolvable:$true] %s151
          %154 = dma.hbm_to_vmem [thread:$0]  %s149, 128, %s152, %s136
        $region24: #{tpu_custom_call.1} parent=19 // pred_fallthru
          _
      $region20: #{tpu_custom_call.1} parent=5 // pred_fallthru
        _
      %p155 = scmp.le.s32.totalorder 1, %s12
      %p156 = scmp.lt.s32.totalorder %s12, 3
      %p157 = pnand %p155, %p156
      %p158 = pneg %p157
      // Predicated region
      $region25: #{tpu_custom_call.1} parent=5 // pred_check
        _
      $region26: #{tpu_custom_call.1} parent=5 // pred_check_branch
        %160 = sbr.rel (%p157) target = $region28
      $region27: #{tpu_custom_call.1} parent=5 // pred_region
        %s161 = ssub.s32 %s12, 1
        %s162 = sand.u32 %s69, 1
        %s163 = scalar_lea.sflag [#allocation5], %s162
        %s164 = sand.u32 %s69, 1
        %s165 = smul.addr %s164, 8
        %s166 = scalar_lea.vmem [#allocation4], %s165
        // Predicated region
        $region29: #{tpu_custom_call.1} parent=27 // pred_check
          %p167 = pneg %p82
        $region30: #{tpu_custom_call.1} parent=27 // pred_check_branch
          %169 = sbr.rel (%p167) target = $region32
        $region31: #{tpu_custom_call.1} parent=27 // pred_region
          %170 = dma.done %s163, 128
        $region32: #{tpu_custom_call.1} parent=27 // pred_fallthru
          _
        %p171 = pneg %p52
        %p172 = pneg %p49
        %s173 = sand.u32 %s69, 1
        %s174 = scalar_lea.sflag [#allocation5], %s173
        %s175 = sand.u32 %s69, 1
        %s176 = smul.addr %s175, 8
        %s177 = scalar_lea.vmem [#allocation4], %s176
        %p178 = pneg %p82
        %p179 = pneg %p79
        %p180 = pneg %p110
        %p181 = pneg %p107
        %p182 = scmp.lt.s32.totalorder %s22, 1
        %s183 = scalar_select %p182, %s22, 1
        %p184 = scmp.lt.s32.totalorder %s23, 0
        %s185 = scalar_select %p184, %s23, 0
        %s186 = sadd.s32 %s185, %s183
        %s187 = smul.addr %s186, 4
        %s188 = scalar_lea.vmem %s2, %s187
        %s189 = smul.u32 2, %s24
        %p190 = scmp.lt.s32.totalorder %s22, 1
        %s191 = scalar_select %p190, %s22, 1
        %p192 = scmp.lt.s32.totalorder %s23, 0
        %s193 = scalar_select %p192, %s23, 0
        %s194 = sadd.s32 %s193, %s191
        %s195 = smul.addr %s194, 4
        %s196 = scalar_lea.vmem %s2, %s195
        %p197 = scmp.eq.s32.totalorder %s24, 0
        // Predicated region
        $region33: #{tpu_custom_call.1} parent=27 // pred_check
          %p198 = pneg %p197
        $region34: #{tpu_custom_call.1} parent=27 // pred_check_branch
          %200 = sbr.rel (%p198) target = $region36
        $region35: #{tpu_custom_call.1} parent=27 // pred_region
          %201 = vst [vmem:[#allocation2] sm:$0xf] 0.0
        $region36: #{tpu_custom_call.1} parent=27 // pred_fallthru
          _
        %s202 = sld [smem:[#allocation3]]
        %v203 = vld [vmem:[%s166] sm:$0xff]
        %v204 = vmax.f32 %v203, 1e-06
        %p205 = scmp.eq.f32.partialorder %s202, 3.0
        // Predicated region
        $region37: #{tpu_custom_call.1} parent=27 // pred_check
          %p206 = pneg %p205
        $region38: #{tpu_custom_call.1} parent=27 // pred_check_branch
          %208 = sbr.rel (%p206) target = $region40
        $region39: #{tpu_custom_call.1} parent=27 // pred_region
          %v209 = vmul.f32 %v204, %v204
          %v210 = vmul.f32 %v209, %v204
          %v212 = vrot.slane %v210, 4
          %v214 = vadd.f32 %v210, %v212
          %v215 = vld [vmem:[#allocation2] sm:$0xf]
          %v216 = vadd.f32 %v215, %v214
          %217 = vst [vmem:[#allocation2] sm:$0xf] %v216
        $region40: #{tpu_custom_call.1} parent=27 // pred_fallthru
          _
        %p218 = pneg %p205
        // Predicated region
        $region41: #{tpu_custom_call.1} parent=27 // pred_check
          _
        $region42: #{tpu_custom_call.1} parent=27 // pred_check_branch
          %220 = sbr.rel (%p205) target = $region44
        $region43: #{tpu_custom_call.1} parent=27 // pred_region
          %v221 = vlog2.pop %v204
          %v222 = vmul.f32 %v221, 0.6931472
          %v223 = vstv %s202
          %v224 = vmul.f32 %v223, %v222
          %v225 = vmul.f32 %v224, 1.442695
          %v226 = vpow.pop %v225
          %v228 = vrot.slane %v226, 4
          %v230 = vadd.f32 %v226, %v228
          %v231 = vld [vmem:[#allocation2] sm:$0xf]
          %v232 = vadd.f32 %v231, %v230
          %233 = vst [vmem:[#allocation2] sm:$0xf] %v232
        $region44: #{tpu_custom_call.1} parent=27 // pred_fallthru
          _
        // Predicated region
        $region45: #{tpu_custom_call.1} parent=27 // pred_check
          %p234 = pneg %p197
        $region46: #{tpu_custom_call.1} parent=27 // pred_check_branch
          %236 = sbr.rel (%p234) target = $region48
        $region47: #{tpu_custom_call.1} parent=27 // pred_region
          %v237 = vld [vmem:[#allocation2] sm:$0xf]
          %vm238 = vcmask 1043456
          %v239 = vsel %vm238, %v237, 0.0
          %240 = vadd.xlane.f32.xlu0 %v239
          %v241 = vpop.xlane.xlu0 %240
          %v242 = vmul.f32 %v241, 0.00390625
          %v243 = vlog2.pop %v242
          %v244 = vmul.f32 %v243, 0.6931472
          %v245 = vstv %s202
          %v246 = vrcp.pop %v245
          %v247 = vmul.f32 %v244, %v246
          %v248 = vmul.f32 %v247, 1.442695
          %v249 = vpow.pop %v248
          %vm250 = vcmask 3072
          %251 = vst.msk [vmem:[%s196] sm:$0xf] %vm250, %v249
        $region48: #{tpu_custom_call.1} parent=27 // pred_fallthru
          _
        %p252 = scmp.lt.s32.totalorder %s22, 1
        %s253 = scalar_select %p252, %s22, 1
        %p254 = scmp.lt.s32.totalorder %s23, 0
        %s255 = scalar_select %p254, %s23, 0
        %s256 = sadd.s32 %s255, %s253
        %s257 = smul.addr %s256, 4
        %s258 = scalar_lea.vmem %s2, %s257
        // Predicated region
        $region49: #{tpu_custom_call.1} parent=27 // pred_check
          %p259 = pneg %p107
        $region50: #{tpu_custom_call.1} parent=27 // pred_check_branch
          %261 = sbr.rel (%p259) target = $region52
        $region51: #{tpu_custom_call.1} parent=27 // pred_region
          _
        $region52: #{tpu_custom_call.1} parent=27 // pred_fallthru
          _
      $region28: #{tpu_custom_call.1} parent=5 // pred_fallthru
        _
      %p262 = scmp.le.s32.totalorder 2, %s12
      // Predicated region
      $region53: #{tpu_custom_call.1} parent=5 // pred_check
        %p263 = pneg %p262
      $region54: #{tpu_custom_call.1} parent=5 // pred_check_branch
        %265 = sbr.rel (%p263) target = $region56
      $region55: #{tpu_custom_call.1} parent=5 // pred_region
        %s266 = ssub.s32 %s12, 2
        // Predicated region
        $region57: #{tpu_custom_call.1} parent=55 // pred_check
          %p267 = pneg %p113
        $region58: #{tpu_custom_call.1} parent=55 // pred_check_branch
          %269 = sbr.rel (%p267) target = $region60
        $region59: #{tpu_custom_call.1} parent=55 // pred_region
          %p270 = scmp.lt.s32.totalorder %s25, 1
          %s271 = scalar_select %p270, %s25, 1
          %p272 = scmp.lt.s32.totalorder %s26, 0
          %s273 = scalar_select %p272, %s26, 0
          %s274 = sadd.s32 %s273, %s271
          %s275 = smul.addr %s274, 4
          %s276 = scalar_lea.vmem %s2, %s275
        $region60: #{tpu_custom_call.1} parent=55 // pred_fallthru
          _
      $region56: #{tpu_custom_call.1} parent=5 // pred_fallthru
        _
    $region6: #{tpu_custom_call.1} parent=1 // loop_footer
      %s16 = sadd.s32 1, %s12
    $region7: #{tpu_custom_call.1} parent=1 // loop_footer_branch
      %11 = sbr.rel target = $region3
    $region8: #{tpu_custom_call.1} parent=1 // loop_exit
      _
    %277 = vsyncpa [#allocation5], 1
    %s278 = scalar_lea.sflag [#allocation5], 1
    %279 = vsyncpa %s278, 1

</llo_original>
